<compile_context>
chip_gen: v7x
topology: tpu7x:2x2x1
jax: 0.10.0
libtpu: 0.0.40
codegen_flags: <defaults>
</compile_context>

<pallas_src>
import jax
import jax.numpy as jnp
from jax import lax
from jax.experimental import pallas as pl
from jax.experimental.pallas import tpu as pltpu


def _down_kernel(x_ref, w1_ref, b1_ref, w2_ref, b2_ref, o_ref):
    """maxpool(2) -> [conv3x3 (BN-folded) -> bias -> ReLU] x 2, one batch chunk."""
    nb, H, W, Cin = x_ref.shape
    Hp, Wp = H // 2, W // 2

    # ---- MaxPool2d(kernel=2, stride=2): max of four strided views. ----
    x00 = x_ref[:, pl.ds(0, Hp, stride=2), pl.ds(0, Wp, stride=2), :]
    x01 = x_ref[:, pl.ds(0, Hp, stride=2), pl.ds(1, Wp, stride=2), :]
    x10 = x_ref[:, pl.ds(1, Hp, stride=2), pl.ds(0, Wp, stride=2), :]
    x11 = x_ref[:, pl.ds(1, Hp, stride=2), pl.ds(1, Wp, stride=2), :]
    pooled = jnp.maximum(jnp.maximum(x00, x01), jnp.maximum(x10, x11))  # f32

    def conv3x3_bias_relu(inp, w_mat, bias):
        # inp: (nb, h, w, c) f32 activations.
        # w_mat: (9*c, co) bf16, BN scale already folded in (wrapper).
        # bias: (1, co) f32.  One im2col matmul on the MXU, f32 accumulate.
        _, h, w, c = inp.shape
        zr = jnp.zeros((nb, 1, w, c), inp.dtype)
        p = jnp.concatenate([zr, inp, zr], axis=1)             # zero halo along H
        zc = jnp.zeros((nb, h + 2, 1, c), inp.dtype)
        p = jnp.concatenate([zc, p, zc], axis=2)               # zero halo along W
        patches = jnp.concatenate(
            [p[:, di:di + h, dj:dj + w, :] for di in range(3) for dj in range(3)],
            axis=-1)                                           # (nb, h, w, 9*c)
        patches = patches.reshape(nb * h * w, 9 * c).astype(jnp.bfloat16)
        acc = jnp.dot(patches, w_mat, preferred_element_type=jnp.float32)
        out = jnp.maximum(acc + bias, 0.0)                     # f32 epilogue (VPU)
        return out.reshape(nb, h, w, -1)

    h1 = conv3x3_bias_relu(pooled, w1_ref[...], b1_ref[...])   # (nb, Hp, Wp, Cmid)
    h2 = conv3x3_bias_relu(h1, w2_ref[...], b2_ref[...])       # (nb, Hp, Wp, Cout)
    o_ref[...] = h2.astype(o_ref.dtype)


def down_pallas(x_nchw, w1_oihw, scale1, bias1, w2_oihw, scale2, bias2,
                *, block_n=None):
    """Down.forward.  x_nchw: (N, Cin, H, W) -> (N, Cout, H//2, W//2).

    scale*/bias* are the eval-mode BatchNorm affine folds
    (scale = gamma/sqrt(var+eps), bias = beta - mean*scale).
    """
    N, Cin, H, W = x_nchw.shape
    assert H % 2 == 0 and W % 2 == 0, "even spatial dims assumed"
    # TODO(synk): odd H/W (PyTorch floor-truncating pool) not handled.
    Hp, Wp = H // 2, W // 2
    Cmid = int(w1_oihw.shape[0])
    Cout = int(w2_oihw.shape[0])

    x = jnp.transpose(x_nchw, (0, 2, 3, 1)).astype(jnp.float32)      # NCHW -> NHWC

    # Fold BN scale into the conv weights; im2col layout (kh*kw*Cin, Cout);
    # bf16 operands for the MXU.
    w1 = jnp.transpose(w1_oihw, (2, 3, 1, 0)) * scale1[None, None, None, :]
    w1 = w1.reshape(9 * Cin, Cmid).astype(jnp.bfloat16)
    w2 = jnp.transpose(w2_oihw, (2, 3, 1, 0)) * scale2[None, None, None, :]
    w2 = w2.reshape(9 * Cmid, Cout).astype(jnp.bfloat16)
    b1 = bias1.reshape(1, Cmid).astype(jnp.float32)
    b2 = bias2.reshape(1, Cout).astype(jnp.float32)

    if block_n is None:
        block_n = max(1, N // 2)   # keep >=2 grid steps when N>=2 (v7x: 2 TCs)
    while N % block_n:
        block_n -= 1
    grid = (N // block_n,)

    out_nhwc = pl.pallas_call(
        _down_kernel,
        out_shape=jax.ShapeDtypeStruct((N, Hp, Wp, Cout), jnp.float32),
        grid=grid,
        in_specs=[
            pl.BlockSpec((block_n, H, W, Cin), lambda n: (n, 0, 0, 0)),
            pl.BlockSpec((9 * Cin, Cmid), lambda n: (0, 0)),
            pl.BlockSpec((1, Cmid), lambda n: (0, 0)),
            pl.BlockSpec((9 * Cmid, Cout), lambda n: (0, 0)),
            pl.BlockSpec((1, Cout), lambda n: (0, 0)),
        ],
        out_specs=pl.BlockSpec((block_n, Hp, Wp, Cout), lambda n: (n, 0, 0, 0)),
        compiler_params=pltpu.CompilerParams(
            dimension_semantics=("parallel",),
            vmem_limit_bytes=64 * 1024 * 1024),
    )(x, w1, b1, w2, b2)
    return jnp.transpose(out_nhwc, (0, 3, 1, 2))                     # NHWC -> NCHW


def down_ref(x_nchw, w1_oihw, scale1, bias1, w2_oihw, scale2, bias2):
    """Pure-JAX reference mirroring the PyTorch forward (BN in eval mode),
    using the same bf16 operand rounding as the kernel's MXU matmuls
    (accumulation stays f32), so differences are accumulation-order only."""
    dn = ("NCHW", "OIHW", "NCHW")
    r = lambda t: t.astype(jnp.bfloat16).astype(jnp.float32)
    xp = lax.reduce_window(x_nchw.astype(jnp.float32), -jnp.inf, lax.max,
                           (1, 1, 2, 2), (1, 1, 2, 2), "VALID")
    w1f = w1_oihw * scale1[:, None, None, None]
    w2f = w2_oihw * scale2[:, None, None, None]
    y = lax.conv_general_dilated(r(xp), r(w1f), (1, 1), ((1, 1), (1, 1)),
                                 dimension_numbers=dn,
                                 preferred_element_type=jnp.float32)
    y = jnp.maximum(y + bias1[None, :, None, None], 0.0)
    y = lax.conv_general_dilated(r(y), r(w2f), (1, 1), ((1, 1), (1, 1)),
                                 dimension_numbers=dn,
                                 preferred_element_type=jnp.float32)
    y = jnp.maximum(y + bias2[None, :, None, None], 0.0)
    return y


if __name__ == "__main__":
    # Down(in_channels=4, out_channels=8); DoubleConv => mid = out = 8.
    N, Cin, H, W = 2, 4, 16, 16
    Cmid = Cout = 8
    eps = 1e-5

    key = jax.random.PRNGKey(0)
    k = jax.random.split(key, 11)
    # Conv weights (PyTorch OIHW layout), kaiming-ish scale.
    w1 = jax.random.normal(k[0], (Cmid, Cin, 3, 3), jnp.float32) * (2.0 / (Cin * 9)) ** 0.5
    w2 = jax.random.normal(k[1], (Cout, Cmid, 3, 3), jnp.float32) * (2.0 / (Cmid * 9)) ** 0.5
    # BatchNorm parameters / running stats, folded to eval-mode affine.
    # TODO(synk): training-mode batch statistics are not reproduced.
    g1 = 0.5 + jax.random.uniform(k[2], (Cmid,), jnp.float32)
    be1 = 0.1 * jax.random.normal(k[3], (Cmid,), jnp.float32)
    m1 = 0.1 * jax.random.normal(k[4], (Cmid,), jnp.float32)
    v1 = 0.5 + jax.random.uniform(k[5], (Cmid,), jnp.float32)
    g2 = 0.5 + jax.random.uniform(k[6], (Cout,), jnp.float32)
    be2 = 0.1 * jax.random.normal(k[7], (Cout,), jnp.float32)
    m2 = 0.1 * jax.random.normal(k[8], (Cout,), jnp.float32)
    v2 = 0.5 + jax.random.uniform(k[9], (Cout,), jnp.float32)

    scale1 = g1 / jnp.sqrt(v1 + eps)
    bias1 = be1 - m1 * scale1
    scale2 = g2 / jnp.sqrt(v2 + eps)
    bias2 = be2 - m2 * scale2

    x = jax.random.normal(k[10], (N, Cin, H, W), jnp.float32)

    out = jax.block_until_ready(down_pallas(x, w1, scale1, bias1, w2, scale2, bias2))
    ref = down_ref(x, w1, scale1, bias1, w2, scale2, bias2)

    assert out.shape == (N, Cout, H // 2, W // 2), out.shape
    assert jnp.allclose(out, ref, atol=1e-3, rtol=1e-3), float(jnp.max(jnp.abs(out - ref)))
    print("KERNEL_OK")
</pallas_src>

<mosaic_0001>
module attributes {stable_mosaic.version = 11 : i64} {
  func.func @_down_kernel(%arg0: i32, %arg1: memref<1x16x16x4xf32, #tpu.memory_space<vmem>>, %arg2: memref<36x8xbf16, #tpu.memory_space<vmem>>, %arg3: memref<1x8xf32, #tpu.memory_space<vmem>>, %arg4: memref<72x8xbf16, #tpu.memory_space<vmem>>, %arg5: memref<1x8xf32, #tpu.memory_space<vmem>>, %arg6: memref<1x8x8x8xf32, #tpu.memory_space<vmem>>) attributes {dimension_semantics = [#tpu.dimension_semantics<parallel>], iteration_bounds = array<i64: 2>, scalar_prefetch = 0 : i64, scratch_operands = 0 : i64, tpu.core_type = #tpu.core_type<tc>, window_params = [{transform_indices = @transform_0, window_bounds = array<i64: 1, 16, 16, 4>}, {pipeline_mode = #tpu.pipeline_mode<synchronous>, transform_indices = @transform_1, window_bounds = array<i64: 36, 8>}, {pipeline_mode = #tpu.pipeline_mode<synchronous>, transform_indices = @transform_2, window_bounds = array<i64: 1, 8>}, {pipeline_mode = #tpu.pipeline_mode<synchronous>, transform_indices = @transform_3, window_bounds = array<i64: 72, 8>}, {pipeline_mode = #tpu.pipeline_mode<synchronous>, transform_indices = @transform_4, window_bounds = array<i64: 1, 8>}, {transform_indices = @transform_5, window_bounds = array<i64: 1, 8, 8, 8>}]} {
    %c0 = arith.constant 0 : index
    %c0_0 = arith.constant 0 : index
    %c0_1 = arith.constant 0 : index
    %c0_2 = arith.constant 0 : index
    %0 = tpu.strided_load %arg1[%c0, %c0_0, %c0_1, %c0_2] {strides = array<i32: 1, 2, 2, 1>} : memref<1x16x16x4xf32, #tpu.memory_space<vmem>>, vector<1x8x8x4xf32>
    %c0_3 = arith.constant 0 : index
    %c0_4 = arith.constant 0 : index
    %c1 = arith.constant 1 : index
    %c0_5 = arith.constant 0 : index
    %1 = tpu.strided_load %arg1[%c0_3, %c0_4, %c1, %c0_5] {strides = array<i32: 1, 2, 2, 1>} : memref<1x16x16x4xf32, #tpu.memory_space<vmem>>, vector<1x8x8x4xf32>
    %c0_6 = arith.constant 0 : index
    %c1_7 = arith.constant 1 : index
    %c0_8 = arith.constant 0 : index
    %c0_9 = arith.constant 0 : index
    %2 = tpu.strided_load %arg1[%c0_6, %c1_7, %c0_8, %c0_9] {strides = array<i32: 1, 2, 2, 1>} : memref<1x16x16x4xf32, #tpu.memory_space<vmem>>, vector<1x8x8x4xf32>
    %c0_10 = arith.constant 0 : index
    %c1_11 = arith.constant 1 : index
    %c1_12 = arith.constant 1 : index
    %c0_13 = arith.constant 0 : index
    %3 = tpu.strided_load %arg1[%c0_10, %c1_11, %c1_12, %c0_13] {strides = array<i32: 1, 2, 2, 1>} : memref<1x16x16x4xf32, #tpu.memory_space<vmem>>, vector<1x8x8x4xf32>
    %4 = arith.maximumf %0, %1 : vector<1x8x8x4xf32>
    %5 = arith.maximumf %2, %3 : vector<1x8x8x4xf32>
    %6 = arith.maximumf %4, %5 : vector<1x8x8x4xf32>
    %c0_14 = arith.constant 0 : index
    %c0_15 = arith.constant 0 : index
    %7 = vector.load %arg2[%c0_14, %c0_15] : memref<36x8xbf16, #tpu.memory_space<vmem>>, vector<36x8xbf16>
    %c0_16 = arith.constant 0 : index
    %c0_17 = arith.constant 0 : index
    %8 = vector.load %arg3[%c0_16, %c0_17] : memref<1x8xf32, #tpu.memory_space<vmem>>, vector<1x8xf32>
    %cst = arith.constant 0.000000e+00 : f32
    %9 = vector.broadcast %cst : f32 to vector<1x1x8x4xf32>
    %10 = tpu.concatenate %9, %6, %9 in 1 : vector<1x1x8x4xf32>, vector<1x8x8x4xf32>, vector<1x1x8x4xf32> -> vector<1x10x8x4xf32>
    %cst_18 = arith.constant 0.000000e+00 : f32
    %11 = vector.broadcast %cst_18 : f32 to vector<1x10x1x4xf32>
    %12 = tpu.concatenate %11, %10, %11 in 2 : vector<1x10x1x4xf32>, vector<1x10x8x4xf32>, vector<1x10x1x4xf32> -> vector<1x10x10x4xf32>
    %13 = vector.extract_strided_slice %12 {offsets = [0, 0, 0, 0], sizes = [1, 8, 8, 4], strides = [1, 1, 1, 1]} : vector<1x10x10x4xf32> to vector<1x8x8x4xf32>
    %14 = vector.extract_strided_slice %12 {offsets = [0, 0, 1, 0], sizes = [1, 8, 8, 4], strides = [1, 1, 1, 1]} : vector<1x10x10x4xf32> to vector<1x8x8x4xf32>
    %15 = vector.extract_strided_slice %12 {offsets = [0, 0, 2, 0], sizes = [1, 8, 8, 4], strides = [1, 1, 1, 1]} : vector<1x10x10x4xf32> to vector<1x8x8x4xf32>
    %16 = vector.extract_strided_slice %12 {offsets = [0, 1, 0, 0], sizes = [1, 8, 8, 4], strides = [1, 1, 1, 1]} : vector<1x10x10x4xf32> to vector<1x8x8x4xf32>
    %17 = vector.extract_strided_slice %12 {offsets = [0, 1, 1, 0], sizes = [1, 8, 8, 4], strides = [1, 1, 1, 1]} : vector<1x10x10x4xf32> to vector<1x8x8x4xf32>
    %18 = vector.extract_strided_slice %12 {offsets = [0, 1, 2, 0], sizes = [1, 8, 8, 4], strides = [1, 1, 1, 1]} : vector<1x10x10x4xf32> to vector<1x8x8x4xf32>
    %19 = vector.extract_strided_slice %12 {offsets = [0, 2, 0, 0], sizes = [1, 8, 8, 4], strides = [1, 1, 1, 1]} : vector<1x10x10x4xf32> to vector<1x8x8x4xf32>
    %20 = vector.extract_strided_slice %12 {offsets = [0, 2, 1, 0], sizes = [1, 8, 8, 4], strides = [1, 1, 1, 1]} : vector<1x10x10x4xf32> to vector<1x8x8x4xf32>
    %21 = vector.extract_strided_slice %12 {offsets = [0, 2, 2, 0], sizes = [1, 8, 8, 4], strides = [1, 1, 1, 1]} : vector<1x10x10x4xf32> to vector<1x8x8x4xf32>
    %22 = tpu.concatenate %13, %14, %15, %16, %17, %18, %19, %20, %21 in 3 : vector<1x8x8x4xf32>, vector<1x8x8x4xf32>, vector<1x8x8x4xf32>, vector<1x8x8x4xf32>, vector<1x8x8x4xf32>, vector<1x8x8x4xf32>, vector<1x8x8x4xf32>, vector<1x8x8x4xf32>, vector<1x8x8x4xf32> -> vector<1x8x8x36xf32>
    %23 = vector.shape_cast %22 : vector<1x8x8x36xf32> to vector<64x36xf32>
    %24 = arith.truncf %23 : vector<64x36xf32> to vector<64x36xbf16>
    %cst_19 = arith.constant dense<0.000000e+00> : vector<64x8xf32>
    %25 = tpu.matmul %24, %7, %cst_19 {dimension_numbers = #tpu.dot_dimension_numbers<[1], [0], [0], [1], [0, 0, 1, 1], [], []>} : vector<64x36xbf16>, vector<36x8xbf16>, vector<64x8xf32> -> vector<64x8xf32>
    %26 = vector.broadcast %8 : vector<1x8xf32> to vector<64x8xf32>
    %27 = arith.addf %25, %26 : vector<64x8xf32>
    %cst_20 = arith.constant 0.000000e+00 : f32
    %28 = vector.broadcast %cst_20 : f32 to vector<64x8xf32>
    %29 = arith.maximumf %27, %28 : vector<64x8xf32>
    %30 = vector.shape_cast %29 : vector<64x8xf32> to vector<1x8x8x8xf32>
    %c0_21 = arith.constant 0 : index
    %c0_22 = arith.constant 0 : index
    %31 = vector.load %arg4[%c0_21, %c0_22] : memref<72x8xbf16, #tpu.memory_space<vmem>>, vector<72x8xbf16>
    %c0_23 = arith.constant 0 : index
    %c0_24 = arith.constant 0 : index
    %32 = vector.load %arg5[%c0_23, %c0_24] : memref<1x8xf32, #tpu.memory_space<vmem>>, vector<1x8xf32>
    %cst_25 = arith.constant 0.000000e+00 : f32
    %33 = vector.broadcast %cst_25 : f32 to vector<1x1x8x8xf32>
    %34 = tpu.concatenate %33, %30, %33 in 1 : vector<1x1x8x8xf32>, vector<1x8x8x8xf32>, vector<1x1x8x8xf32> -> vector<1x10x8x8xf32>
    %cst_26 = arith.constant 0.000000e+00 : f32
    %35 = vector.broadcast %cst_26 : f32 to vector<1x10x1x8xf32>
    %36 = tpu.concatenate %35, %34, %35 in 2 : vector<1x10x1x8xf32>, vector<1x10x8x8xf32>, vector<1x10x1x8xf32> -> vector<1x10x10x8xf32>
    %37 = vector.extract_strided_slice %36 {offsets = [0, 0, 0, 0], sizes = [1, 8, 8, 8], strides = [1, 1, 1, 1]} : vector<1x10x10x8xf32> to vector<1x8x8x8xf32>
    %38 = vector.extract_strided_slice %36 {offsets = [0, 0, 1, 0], sizes = [1, 8, 8, 8], strides = [1, 1, 1, 1]} : vector<1x10x10x8xf32> to vector<1x8x8x8xf32>
    %39 = vector.extract_strided_slice %36 {offsets = [0, 0, 2, 0], sizes = [1, 8, 8, 8], strides = [1, 1, 1, 1]} : vector<1x10x10x8xf32> to vector<1x8x8x8xf32>
    %40 = vector.extract_strided_slice %36 {offsets = [0, 1, 0, 0], sizes = [1, 8, 8, 8], strides = [1, 1, 1, 1]} : vector<1x10x10x8xf32> to vector<1x8x8x8xf32>
    %41 = vector.extract_strided_slice %36 {offsets = [0, 1, 1, 0], sizes = [1, 8, 8, 8], strides = [1, 1, 1, 1]} : vector<1x10x10x8xf32> to vector<1x8x8x8xf32>
    %42 = vector.extract_strided_slice %36 {offsets = [0, 1, 2, 0], sizes = [1, 8, 8, 8], strides = [1, 1, 1, 1]} : vector<1x10x10x8xf32> to vector<1x8x8x8xf32>
    %43 = vector.extract_strided_slice %36 {offsets = [0, 2, 0, 0], sizes = [1, 8, 8, 8], strides = [1, 1, 1, 1]} : vector<1x10x10x8xf32> to vector<1x8x8x8xf32>
    %44 = vector.extract_strided_slice %36 {offsets = [0, 2, 1, 0], sizes = [1, 8, 8, 8], strides = [1, 1, 1, 1]} : vector<1x10x10x8xf32> to vector<1x8x8x8xf32>
    %45 = vector.extract_strided_slice %36 {offsets = [0, 2, 2, 0], sizes = [1, 8, 8, 8], strides = [1, 1, 1, 1]} : vector<1x10x10x8xf32> to vector<1x8x8x8xf32>
    %46 = tpu.concatenate %37, %38, %39, %40, %41, %42, %43, %44, %45 in 3 : vector<1x8x8x8xf32>, vector<1x8x8x8xf32>, vector<1x8x8x8xf32>, vector<1x8x8x8xf32>, vector<1x8x8x8xf32>, vector<1x8x8x8xf32>, vector<1x8x8x8xf32>, vector<1x8x8x8xf32>, vector<1x8x8x8xf32> -> vector<1x8x8x72xf32>
    %47 = vector.shape_cast %46 : vector<1x8x8x72xf32> to vector<64x72xf32>
    %48 = arith.truncf %47 : vector<64x72xf32> to vector<64x72xbf16>
    %cst_27 = arith.constant dense<0.000000e+00> : vector<64x8xf32>
    %49 = tpu.matmul %48, %31, %cst_27 {dimension_numbers = #tpu.dot_dimension_numbers<[1], [0], [0], [1], [0, 0, 1, 1], [], []>} : vector<64x72xbf16>, vector<72x8xbf16>, vector<64x8xf32> -> vector<64x8xf32>
    %50 = vector.broadcast %32 : vector<1x8xf32> to vector<64x8xf32>
    %51 = arith.addf %49, %50 : vector<64x8xf32>
    %cst_28 = arith.constant 0.000000e+00 : f32
    %52 = vector.broadcast %cst_28 : f32 to vector<64x8xf32>
    %53 = arith.maximumf %51, %52 : vector<64x8xf32>
    %54 = vector.shape_cast %53 : vector<64x8xf32> to vector<1x8x8x8xf32>
    %c0_29 = arith.constant 0 : index
    %c0_30 = arith.constant 0 : index
    %c0_31 = arith.constant 0 : index
    %c0_32 = arith.constant 0 : index
    %55 = vector.load %arg6[%c0_29, %c0_30, %c0_31, %c0_32] : memref<1x8x8x8xf32, #tpu.memory_space<vmem>>, vector<1x8x8x8xf32>
    tpu.vector_store %arg6[%c0_29, %c0_30, %c0_31, %c0_32], %54 {strides = array<i32>} : memref<1x8x8x8xf32, #tpu.memory_space<vmem>>, vector<1x8x8x8xf32>,
    return
  }
  func.func @transform_0(%arg0: i32) -> (i32, i32, i32, i32) {
    %c0_i32 = arith.constant 0 : i32
    %c0_i32_0 = arith.constant 0 : i32
    %c0_i32_1 = arith.constant 0 : i32
    %c0_i32_2 = arith.constant 0 : i32
    return %arg0, %c0_i32, %c0_i32_0, %c0_i32_1 : i32, i32, i32, i32
  }
  func.func @transform_1(%arg0: i32) -> (i32, i32) {
    %c0_i32 = arith.constant 0 : i32
    %c0_i32_0 = arith.constant 0 : i32
    %c0_i32_1 = arith.constant 0 : i32
    return %c0_i32, %c0_i32_0 : i32, i32
  }
  func.func @transform_2(%arg0: i32) -> (i32, i32) {
    %c0_i32 = arith.constant 0 : i32
    %c0_i32_0 = arith.constant 0 : i32
    %c0_i32_1 = arith.constant 0 : i32
    return %c0_i32, %c0_i32_0 : i32, i32
  }
  func.func @transform_3(%arg0: i32) -> (i32, i32) {
    %c0_i32 = arith.constant 0 : i32
    %c0_i32_0 = arith.constant 0 : i32
    %c0_i32_1 = arith.constant 0 : i32
    return %c0_i32, %c0_i32_0 : i32, i32
  }
  func.func @transform_4(%arg0: i32) -> (i32, i32) {
    %c0_i32 = arith.constant 0 : i32
    %c0_i32_0 = arith.constant 0 : i32
    %c0_i32_1 = arith.constant 0 : i32
    return %c0_i32, %c0_i32_0 : i32, i32
  }
  func.func @transform_5(%arg0: i32) -> (i32, i32, i32, i32) {
    %c0_i32 = arith.constant 0 : i32
    %c0_i32_0 = arith.constant 0 : i32
    %c0_i32_1 = arith.constant 0 : i32
    %c0_i32_2 = arith.constant 0 : i32
    return %arg0, %c0_i32, %c0_i32_0, %c0_i32_1 : i32, i32, i32, i32
  }
}

</mosaic_0001>

<llo_original>
// kernel: tpu_custom_call.1
$region0: #{tpu_custom_call.1}
  #allocation0 [shape = 'u32[]', space=smem, size = 0x4, offset = 0x4, fixed_abs, tag = 'smem constant byte address 0x4 - core index']
  #allocation1 [shape = 'u32[144,128]{1,0:T(1,128)}', space=vmem, size = 0x12000, scoped, tag = 'internal scratch']
  %s0 = inlined_call_operand.hbm [shape: f32[2,16,16,4], index: 0, kind: input, shape index: {}]
  %s1 = inlined_call_operand.hbm [shape: bf16[36,8], index: 1, kind: input, shape index: {}]
  %s2 = inlined_call_operand.hbm [shape: f32[1,8], index: 2, kind: input, shape index: {}]
  %s3 = inlined_call_operand.hbm [shape: bf16[72,8], index: 3, kind: input, shape index: {}]
  %s4 = inlined_call_operand.hbm [shape: f32[1,8], index: 4, kind: input, shape index: {}]
  %s5 = inlined_call_operand.hbm [shape: f32[2,8,8,8], index: 5, kind: output, shape index: {}]
  %s6 = sld [smem:[#allocation0]]
  $region73: #{tpu_custom_call.1} parent=0
    _
  %s8 = ssub.s32 1, %s6
  %s9 = scalar_select 0, %s8, %s6
  $region1: #{tpu_custom_call.1} parent=0
    #allocation2 [shape = 'u8[262144]{0}', space=vmem, size = 0x40000, scoped, tag = 'input window, operand 0']
    #allocation3 [shape = 's32[2]{0}', space=sflag, size = 0x8, scoped, tag = 'scoped memory for tpu_custom_call.1']
    #allocation4 [shape = 's32[2]{0}', space=sflag, size = 0x8, scoped, tag = 'scoped memory for tpu_custom_call.1']
    #allocation5 [shape = 'u8[10240]{0}', space=vmem, size = 0x2800, scoped, tag = 'input window, operand 1, single buffered']
    #allocation6 [shape = 's32[1]{0}', space=sflag, size = 0x4, scoped, tag = 'scoped memory for tpu_custom_call.1']
    #allocation7 [shape = 'u8[512]{0}', space=vmem, size = 0x400, scoped, tag = 'input window, operand 2, single buffered']
    #allocation8 [shape = 'u8[18432]{0}', space=vmem, size = 0x4800, scoped, tag = 'input window, operand 3, single buffered']
    #allocation9 [shape = 's32[1]{0}', space=sflag, size = 0x4, scoped, tag = 'scoped memory for tpu_custom_call.1']
    #allocation10 [shape = 'u8[512]{0}', space=vmem, size = 0x400, scoped, tag = 'input window, operand 4, single buffered']
    #allocation11 [shape = 'u8[65536]{0}', space=vmem, size = 0x10000, scoped, tag = 'output window, operand 0']
    %10 = vsyncpa [#allocation3], 0
    %s11 = scalar_lea.sflag [#allocation3], 1
    %12 = vsyncpa %s11, 0
    %13 = vsyncpa [#allocation6], 0
    %14 = vsyncpa [#allocation9], 0
    %15 = vsyncpa [#allocation4], 0
    %s16 = scalar_lea.sflag [#allocation4], 1
    %17 = vsyncpa %s16, 0
    loop: start=0, step=1, limit=4
    $region2: #{tpu_custom_call.1} parent=1 // loop_pre_header
      _
    $region3: #{tpu_custom_call.1} parent=1 // loop_header
      %s19 = sphi 0, %s23
      %p20 = scmp.ge.s32.totalorder %s19, 4
      %s29 = sphi 0, %s31
      %s32 = sphi 0, %s29
      %s33 = sphi 0, %s32
      %s49 = sphi 0, %s33
      %s53 = sphi 0, %s53
      %s55 = sphi 0, %s53
      %s56 = sphi 0, %s55
      %s70 = sphi 0, %s56
      %s74 = sphi 0, %s74
      %s76 = sphi 0, %s74
      %s77 = sphi 0, %s76
      %s91 = sphi 0, %s77
      %s95 = sphi 0, %s95
      %s97 = sphi 0, %s95
      %s98 = sphi 0, %s97
      %s112 = sphi 0, %s98
      %s116 = sphi 0, %s116
      %s118 = sphi 0, %s116
      %s119 = sphi 0, %s118
      %s133 = sphi 0, %s119
      %s139 = sphi 0, %s141
      %s142 = sphi 0, %s139
      %s143 = sphi 0, %s142
      %s159 = sphi 0, %s143
    $region4: #{tpu_custom_call.1} parent=1 // loop_header_branch
      %22 = sbr.rel (%p20) target = $region8
    $region5: #{tpu_custom_call.1} parent=1 // loop_body
      %s24 = ssub.s32 %s19, 1
      %s25 = ssub.s32 %s19, 2
      %s26 = sadd.s32 %s19, 1
      %s27 = ssub.s32 %s19, %s26
      %p28 = scmp.eq.s32.totalorder %s27, 0
      %s30 = sadd.s32 %s29, 1
      %s31 = scalar_select %p28, %s29, %s30
      %p34 = pneg %p28
      %p35 = scmp.eq.s32.totalorder %s19, 1
      %p36 = por %p34, %p35
      %p37 = scmp.ne.s32.totalorder %s29, %s32
      %p38 = scmp.eq.s32.totalorder %s19, 0
      %p39 = por %p37, %p38
      %p40 = scmp.ne.s32.totalorder %s29, %s32
      %p41 = scmp.eq.s32.totalorder %s24, 1
      %p42 = por %p40, %p41
      %p43 = scmp.ne.s32.totalorder %s32, %s33
      %p44 = scmp.eq.s32.totalorder %s24, 0
      %p45 = por %p43, %p44
      %p46 = scmp.ne.s32.totalorder %s32, %s33
      %p47 = scmp.eq.s32.totalorder %s25, 1
      %p48 = por %p46, %p47
      %p50 = scmp.ne.s32.totalorder %s33, %s49
      %p51 = scmp.eq.s32.totalorder %s25, 0
      %p52 = por %p50, %p51
      %s54 = sadd.s32 %s53, 1
      %p57 = scmp.eq.s32.totalorder %s19, 1
      %p58 = scmp.ne.s32.totalorder %s53, %s55
      %p59 = scmp.eq.s32.totalorder %s19, 0
      %p60 = por %p58, %p59
      %p61 = scmp.ne.s32.totalorder %s53, %s55
      %p62 = scmp.eq.s32.totalorder %s24, 1
      %p63 = por %p61, %p62
      %p64 = scmp.ne.s32.totalorder %s55, %s56
      %p65 = scmp.eq.s32.totalorder %s24, 0
      %p66 = por %p64, %p65
      %p67 = scmp.ne.s32.totalorder %s55, %s56
      %p68 = scmp.eq.s32.totalorder %s25, 1
      %p69 = por %p67, %p68
      %p71 = scmp.ne.s32.totalorder %s56, %s70
      %p72 = scmp.eq.s32.totalorder %s25, 0
      %p73 = por %p71, %p72
      %s75 = sadd.s32 %s74, 1
      %p78 = scmp.eq.s32.totalorder %s19, 1
      %p79 = scmp.ne.s32.totalorder %s74, %s76
      %p80 = scmp.eq.s32.totalorder %s19, 0
      %p81 = por %p79, %p80
      %p82 = scmp.ne.s32.totalorder %s74, %s76
      %p83 = scmp.eq.s32.totalorder %s24, 1
      %p84 = por %p82, %p83
      %p85 = scmp.ne.s32.totalorder %s76, %s77
      %p86 = scmp.eq.s32.totalorder %s24, 0
      %p87 = por %p85, %p86
      %p88 = scmp.ne.s32.totalorder %s76, %s77
      %p89 = scmp.eq.s32.totalorder %s25, 1
      %p90 = por %p88, %p89
      %p92 = scmp.ne.s32.totalorder %s77, %s91
      %p93 = scmp.eq.s32.totalorder %s25, 0
      %p94 = por %p92, %p93
      %s96 = sadd.s32 %s95, 1
      %p99 = scmp.eq.s32.totalorder %s19, 1
      %p100 = scmp.ne.s32.totalorder %s95, %s97
      %p101 = scmp.eq.s32.totalorder %s19, 0
      %p102 = por %p100, %p101
      %p103 = scmp.ne.s32.totalorder %s95, %s97
      %p104 = scmp.eq.s32.totalorder %s24, 1
      %p105 = por %p103, %p104
      %p106 = scmp.ne.s32.totalorder %s97, %s98
      %p107 = scmp.eq.s32.totalorder %s24, 0
      %p108 = por %p106, %p107
      %p109 = scmp.ne.s32.totalorder %s97, %s98
      %p110 = scmp.eq.s32.totalorder %s25, 1
      %p111 = por %p109, %p110
      %p113 = scmp.ne.s32.totalorder %s98, %s112
      %p114 = scmp.eq.s32.totalorder %s25, 0
      %p115 = por %p113, %p114
      %s117 = sadd.s32 %s116, 1
      %p120 = scmp.eq.s32.totalorder %s19, 1
      %p121 = scmp.ne.s32.totalorder %s116, %s118
      %p122 = scmp.eq.s32.totalorder %s19, 0
      %p123 = por %p121, %p122
      %p124 = scmp.ne.s32.totalorder %s116, %s118
      %p125 = scmp.eq.s32.totalorder %s24, 1
      %p126 = por %p124, %p125
      %p127 = scmp.ne.s32.totalorder %s118, %s119
      %p128 = scmp.eq.s32.totalorder %s24, 0
      %p129 = por %p127, %p128
      %p130 = scmp.ne.s32.totalorder %s118, %s119
      %p131 = scmp.eq.s32.totalorder %s25, 1
      %p132 = por %p130, %p131
      %p134 = scmp.ne.s32.totalorder %s119, %s133
      %p135 = scmp.eq.s32.totalorder %s25, 0
      %p136 = por %p134, %p135
      %s137 = ssub.s32 %s19, %s26
      %p138 = scmp.eq.s32.totalorder %s137, 0
      %s140 = sadd.s32 %s139, 1
      %s141 = scalar_select %p138, %s139, %s140
      %p144 = pneg %p138
      %p145 = scmp.eq.s32.totalorder %s19, 1
      %p146 = por %p144, %p145
      %p147 = scmp.ne.s32.totalorder %s139, %s142
      %p148 = scmp.eq.s32.totalorder %s19, 0
      %p149 = por %p147, %p148
      %p150 = scmp.ne.s32.totalorder %s139, %s142
      %p151 = scmp.eq.s32.totalorder %s24, 1
      %p152 = por %p150, %p151
      %p153 = scmp.ne.s32.totalorder %s142, %s143
      %p154 = scmp.eq.s32.totalorder %s24, 0
      %p155 = por %p153, %p154
      %p156 = scmp.ne.s32.totalorder %s142, %s143
      %p157 = scmp.eq.s32.totalorder %s25, 1
      %p158 = por %p156, %p157
      %p160 = scmp.ne.s32.totalorder %s143, %s159
      %p161 = scmp.eq.s32.totalorder %s25, 0
      %p162 = por %p160, %p161
      %p163 = scmp.le.s32.totalorder 1, %s19
      %p164 = scmp.lt.s32.totalorder %s19, 3
      %p165 = pnand %p163, %p164
      %p166 = pneg %p165
      // Predicated region
      $region9: #{tpu_custom_call.1} parent=5 // pred_check
        _
      $region10: #{tpu_custom_call.1} parent=5 // pred_check_branch
        %168 = sbr.rel (%p165) target = $region12
      $region11: #{tpu_custom_call.1} parent=5 // pred_region
        %s169 = ssub.s32 %s19, 1
        // Predicated region
        $region13: #{tpu_custom_call.1} parent=11 // pred_check
          %p170 = pneg %p66
        $region14: #{tpu_custom_call.1} parent=11 // pred_check_branch
          %172 = sbr.rel (%p170) target = $region16
        $region15: #{tpu_custom_call.1} parent=11 // pred_region
          %s174 = ssub.s32 320, 320
          %175 = vsyncadd [#allocation6], %s174
          %s176 = sshll.u32 [#allocation5], 4
          %s177 = int_to_ptr.vmem [resolvable:$true] %s176
          %182 = dma.hbm_to_vmem [thread:$0]  %s1, 320, %s177, [#allocation6], 64, 64, 4
        $region16: #{tpu_custom_call.1} parent=11 // pred_fallthru
          _
        // Predicated region
        $region17: #{tpu_custom_call.1} parent=11 // pred_check
          %p183 = pneg %p87
        $region18: #{tpu_custom_call.1} parent=11 // pred_check_branch
          %185 = sbr.rel (%p183) target = $region20
        $region19: #{tpu_custom_call.1} parent=11 // pred_region
          %s187 = ssub.s32 16, 16
          %188 = vsyncadd [#allocation6], %s187
          %s190 = sshll.u32 [#allocation7], 4
          %s191 = int_to_ptr.vmem [resolvable:$true] %s190
          %193 = dma.hbm_to_vmem [thread:$0]  %s2, 16, %s191, [#allocation6]
        $region20: #{tpu_custom_call.1} parent=11 // pred_fallthru
          _
        // Predicated region
        $region21: #{tpu_custom_call.1} parent=11 // pred_check
          %p194 = pneg %p108
        $region22: #{tpu_custom_call.1} parent=11 // pred_check_branch
          %196 = sbr.rel (%p194) target = $region24
        $region23: #{tpu_custom_call.1} parent=11 // pred_region
          %s198 = ssub.s32 576, 576
          %199 = vsyncadd [#allocation9], %s198
          %s200 = sshll.u32 [#allocation8], 4
          %s201 = int_to_ptr.vmem [resolvable:$true] %s200
          %206 = dma.hbm_to_vmem [thread:$0]  %s3, 576, %s201, [#allocation9], 64, 64, 4
        $region24: #{tpu_custom_call.1} parent=11 // pred_fallthru
          _
        // Predicated region
        $region25: #{tpu_custom_call.1} parent=11 // pred_check
          %p207 = pneg %p129
        $region26: #{tpu_custom_call.1} parent=11 // pred_check_branch
          %209 = sbr.rel (%p207) target = $region28
        $region27: #{tpu_custom_call.1} parent=11 // pred_region
          %s211 = ssub.s32 16, 16
          %212 = vsyncadd [#allocation9], %s211
          %s214 = sshll.u32 [#allocation10], 4
          %s215 = int_to_ptr.vmem [resolvable:$true] %s214
          %217 = dma.hbm_to_vmem [thread:$0]  %s4, 16, %s215, [#allocation9]
        $region28: #{tpu_custom_call.1} parent=11 // pred_fallthru
          _
      $region12: #{tpu_custom_call.1} parent=5 // pred_fallthru
        _
      %p218 = scmp.lt.s32.totalorder %s19, 2
      // Predicated region
      $region29: #{tpu_custom_call.1} parent=5 // pred_check
        %p219 = pneg %p218
      $region30: #{tpu_custom_call.1} parent=5 // pred_check_branch
        %221 = sbr.rel (%p219) target = $region32
      $region31: #{tpu_custom_call.1} parent=5 // pred_region
        // Predicated region
        $region33: #{tpu_custom_call.1} parent=31 // pred_check
          %p222 = pneg %p39
        $region34: #{tpu_custom_call.1} parent=31 // pred_check_branch
          %224 = sbr.rel (%p222) target = $region36
        $region35: #{tpu_custom_call.1} parent=31 // pred_region
          %s225 = sand.u32 %s29, 1
          %s226 = scalar_lea.sflag [#allocation3], %s225
          %s227 = sand.u32 %s29, 1
          %s228 = smul.addr %s227, 256
          %s229 = scalar_lea.vmem [#allocation2], %s228
          %s231 = ssub.s32 4096, 4096
          %232 = vsyncadd %s226, %s231
          %s233 = smul.addr %s19, 32
          %s234 = smul.addr %s233, 128
          %s235 = scalar_lea.hbm %s0, %s234
          %s236 = sshll.u32 %s229, 4
          %s237 = int_to_ptr.vmem [resolvable:$true] %s236
          %242 = dma.hbm_to_vmem [thread:$0]  %s235, 4096, %s237, %s226, 128, 128, 8
        $region36: #{tpu_custom_call.1} parent=31 // pred_fallthru
          _
      $region32: #{tpu_custom_call.1} parent=5 // pred_fallthru
        _
      %p243 = scmp.le.s32.totalorder 1, %s19
      %p244 = scmp.lt.s32.totalorder %s19, 3
      %p245 = pnand %p243, %p244
      %p246 = pneg %p245
      // Predicated region
      $region37: #{tpu_custom_call.1} parent=5 // pred_check
        _
      $region38: #{tpu_custom_call.1} parent=5 // pred_check_branch
        %248 = sbr.rel (%p245) target = $region40
      $region39: #{tpu_custom_call.1} parent=5 // pred_region
        %s249 = ssub.s32 %s19, 1
        %s250 = sand.u32 %s32, 1
        %s251 = scalar_lea.sflag [#allocation3], %s250
        %s252 = sand.u32 %s32, 1
        %s253 = smul.addr %s252, 256
        %s254 = scalar_lea.vmem [#allocation2], %s253
        // Predicated region
        $region41: #{tpu_custom_call.1} parent=39 // pred_check
          %p255 = pneg %p45
        $region42: #{tpu_custom_call.1} parent=39 // pred_check_branch
          %257 = sbr.rel (%p255) target = $region44
        $region43: #{tpu_custom_call.1} parent=39 // pred_region
          %258 = dma.done %s251, 4096
        $region44: #{tpu_custom_call.1} parent=39 // pred_fallthru
          _
        // Predicated region
        $region45: #{tpu_custom_call.1} parent=39 // pred_check
          %p259 = pneg %p66
        $region46: #{tpu_custom_call.1} parent=39 // pred_check_branch
          %261 = sbr.rel (%p259) target = $region48
        $region47: #{tpu_custom_call.1} parent=39 // pred_region
          %262 = dma.done [#allocation6], 320
        $region48: #{tpu_custom_call.1} parent=39 // pred_fallthru
          _
        // Predicated region
        $region49: #{tpu_custom_call.1} parent=39 // pred_check
          %p263 = pneg %p87
        $region50: #{tpu_custom_call.1} parent=39 // pred_check_branch
          %265 = sbr.rel (%p263) target = $region52
        $region51: #{tpu_custom_call.1} parent=39 // pred_region
          %266 = dma.done [#allocation6], 16
        $region52: #{tpu_custom_call.1} parent=39 // pred_fallthru
          _
        // Predicated region
        $region53: #{tpu_custom_call.1} parent=39 // pred_check
          %p267 = pneg %p108
        $region54: #{tpu_custom_call.1} parent=39 // pred_check_branch
          %269 = sbr.rel (%p267) target = $region56
        $region55: #{tpu_custom_call.1} parent=39 // pred_region
          %270 = dma.done [#allocation9], 576
        $region56: #{tpu_custom_call.1} parent=39 // pred_fallthru
          _
        // Predicated region
        $region57: #{tpu_custom_call.1} parent=39 // pred_check
          %p271 = pneg %p129
        $region58: #{tpu_custom_call.1} parent=39 // pred_check_branch
          %273 = sbr.rel (%p271) target = $region60
        $region59: #{tpu_custom_call.1} parent=39 // pred_region
          %274 = dma.done [#allocation9], 16
        $region60: #{tpu_custom_call.1} parent=39 // pred_fallthru
          _
        %s275 = sand.u32 %s32, 1
        %s276 = scalar_lea.sflag [#allocation3], %s275
        %s277 = sand.u32 %s32, 1
        %s278 = smul.addr %s277, 256
        %s279 = scalar_lea.vmem [#allocation2], %s278
        %p280 = pneg %p45
        %p281 = pneg %p42
        %p282 = pneg %p66
        %p283 = pneg %p63
        %p284 = pneg %p87
        %p285 = pneg %p84
        %p286 = pneg %p108
        %p287 = pneg %p105
        %p288 = pneg %p129
        %p289 = pneg %p126
        %p290 = pneg %p155
        %p291 = pneg %p152
        %s292 = sand.u32 %s142, 1
        %s293 = scalar_lea.sflag [#allocation4], %s292
        %s294 = sand.u32 %s142, 1
        %s295 = smul.addr %s294, 64
        %s296 = scalar_lea.vmem [#allocation11], %s295
        %v298 = vld [vmem:[%s254] ss:$2 sm:$0xff]
        %s299 = scalar_lea.vmem %s254, 32 [#allocation2]
        %v300 = vld [vmem:[%s299] ss:$2 sm:$0xff]
        %s301 = scalar_lea.vmem %s254, 64 [#allocation2]
        %v302 = vld [vmem:[%s301] ss:$2 sm:$0xff]
        %s303 = scalar_lea.vmem %s254, 96 [#allocation2]
        %v304 = vld [vmem:[%s303] ss:$2 sm:$0xff]
        %s305 = scalar_lea.vmem %s254, 128 [#allocation2]
        %v306 = vld [vmem:[%s305] ss:$2 sm:$0xff]
        %s307 = scalar_lea.vmem %s254, 160 [#allocation2]
        %v308 = vld [vmem:[%s307] ss:$2 sm:$0xff]
        %s309 = scalar_lea.vmem %s254, 192 [#allocation2]
        %v310 = vld [vmem:[%s309] ss:$2 sm:$0xff]
        %s311 = scalar_lea.vmem %s254, 224 [#allocation2]
        %v312 = vld [vmem:[%s311] ss:$2 sm:$0xff]
        %s313 = scalar_lea.vmem %s254, 1 [#allocation2]
        %v314 = vld [vmem:[%s313] ss:$2 sm:$0xff]
        %s315 = scalar_lea.vmem %s254, 33 [#allocation2]
        %v316 = vld [vmem:[%s315] ss:$2 sm:$0xff]
        %s317 = scalar_lea.vmem %s254, 65 [#allocation2]
        %v318 = vld [vmem:[%s317] ss:$2 sm:$0xff]
        %s319 = scalar_lea.vmem %s254, 97 [#allocation2]
        %v320 = vld [vmem:[%s319] ss:$2 sm:$0xff]
        %s321 = scalar_lea.vmem %s254, 129 [#allocation2]
        %v322 = vld [vmem:[%s321] ss:$2 sm:$0xff]
        %s323 = scalar_lea.vmem %s254, 161 [#allocation2]
        %v324 = vld [vmem:[%s323] ss:$2 sm:$0xff]
        %s325 = scalar_lea.vmem %s254, 193 [#allocation2]
        %v326 = vld [vmem:[%s325] ss:$2 sm:$0xff]
        %s327 = scalar_lea.vmem %s254, 225 [#allocation2]
        %v328 = vld [vmem:[%s327] ss:$2 sm:$0xff]
        %s329 = scalar_lea.vmem %s254, 16 [#allocation2]
        %v330 = vld [vmem:[%s329] ss:$2 sm:$0xff]
        %s331 = scalar_lea.vmem %s329, 32 [#allocation2]
        %v332 = vld [vmem:[%s331] ss:$2 sm:$0xff]
        %s333 = scalar_lea.vmem %s329, 64 [#allocation2]
        %v334 = vld [vmem:[%s333] ss:$2 sm:$0xff]
        %s335 = scalar_lea.vmem %s329, 96 [#allocation2]
        %v336 = vld [vmem:[%s335] ss:$2 sm:$0xff]
        %s337 = scalar_lea.vmem %s329, 128 [#allocation2]
        %v338 = vld [vmem:[%s337] ss:$2 sm:$0xff]
        %s339 = scalar_lea.vmem %s329, 160 [#allocation2]
        %v340 = vld [vmem:[%s339] ss:$2 sm:$0xff]
        %s341 = scalar_lea.vmem %s329, 192 [#allocation2]
        %v342 = vld [vmem:[%s341] ss:$2 sm:$0xff]
        %s343 = scalar_lea.vmem %s329, 224 [#allocation2]
        %v344 = vld [vmem:[%s343] ss:$2 sm:$0xff]
        %s345 = scalar_lea.vmem %s329, 1 [#allocation2]
        %v346 = vld [vmem:[%s345] ss:$2 sm:$0xff]
        %s347 = scalar_lea.vmem %s329, 33 [#allocation2]
        %v348 = vld [vmem:[%s347] ss:$2 sm:$0xff]
        %s349 = scalar_lea.vmem %s329, 65 [#allocation2]
        %v350 = vld [vmem:[%s349] ss:$2 sm:$0xff]
        %s351 = scalar_lea.vmem %s329, 97 [#allocation2]
        %v352 = vld [vmem:[%s351] ss:$2 sm:$0xff]
        %s353 = scalar_lea.vmem %s329, 129 [#allocation2]
        %v354 = vld [vmem:[%s353] ss:$2 sm:$0xff]
        %s355 = scalar_lea.vmem %s329, 161 [#allocation2]
        %v356 = vld [vmem:[%s355] ss:$2 sm:$0xff]
        %s357 = scalar_lea.vmem %s329, 193 [#allocation2]
        %v358 = vld [vmem:[%s357] ss:$2 sm:$0xff]
        %s359 = scalar_lea.vmem %s329, 225 [#allocation2]
        %v360 = vld [vmem:[%s359] ss:$2 sm:$0xff]
        %v361 = vmax.f32 %v298, %v314
        %v362 = vmax.f32 %v300, %v316
        %v363 = vmax.f32 %v302, %v318
        %v364 = vmax.f32 %v304, %v320
        %v365 = vmax.f32 %v306, %v322
        %v366 = vmax.f32 %v308, %v324
        %v367 = vmax.f32 %v310, %v326
        %v368 = vmax.f32 %v312, %v328
        %v369 = vmax.f32 %v330, %v346
        %v370 = vmax.f32 %v332, %v348
        %v371 = vmax.f32 %v334, %v350
        %v372 = vmax.f32 %v336, %v352
        %v373 = vmax.f32 %v338, %v354
        %v374 = vmax.f32 %v340, %v356
        %v375 = vmax.f32 %v342, %v358
        %v376 = vmax.f32 %v344, %v360
        %v377 = vmax.f32 %v361, %v369
        %v378 = vmax.f32 %v362, %v370
        %v379 = vmax.f32 %v363, %v371
        %v380 = vmax.f32 %v364, %v372
        %v381 = vmax.f32 %v365, %v373
        %v382 = vmax.f32 %v366, %v374
        %v383 = vmax.f32 %v367, %v375
        %v384 = vmax.f32 %v368, %v376
        %v385 = vld [vmem:[#allocation5] sm:$0xf]
        %v386 = vld [vmem:[#allocation5 + $0x4] sm:$0xf]
        %v387 = vld [vmem:[#allocation5 + $0x8] sm:$0xf]
        %v388 = vld [vmem:[#allocation5 + $0xc] sm:$0xf]
        %v389 = vld [vmem:[#allocation5 + $0x10] sm:$0x3]
        %v390 = vld [vmem:[#allocation7] sm:$0x1]
        %v400 = vrot.slane 0.0, 7
        %v401 = vrot.slane %v377, 7
        %v402 = vrot.slane %v378, 7
        %v403 = vrot.slane %v379, 7
        %v404 = vrot.slane %v380, 7
        %v405 = vrot.slane %v381, 7
        %v406 = vrot.slane %v382, 7
        %v407 = vrot.slane %v383, 7
        %v408 = vrot.slane %v384, 7
        %vm418 = vcmask 1040384
        %v419 = vsel %vm418, 0.0, %v400
        %v420 = vsel %vm418, 0.0, %v401
        %v421 = vsel %vm418, 0.0, %v402
        %v422 = vsel %vm418, 0.0, %v403
        %v423 = vsel %vm418, 0.0, %v404
        %v424 = vsel %vm418, 0.0, %v405
        %v425 = vsel %vm418, 0.0, %v406
        %v426 = vsel %vm418, 0.0, %v407
        %v427 = vsel %vm418, 0.0, %v408
        %v428 = vsel %vm418, %v400, 0.0
        %v429 = vsel %vm418, %v401, 0.0
        %v430 = vsel %vm418, %v402, 0.0
        %v431 = vsel %vm418, %v403, 0.0
        %v432 = vsel %vm418, %v404, 0.0
        %v433 = vsel %vm418, %v405, 0.0
        %v434 = vsel %vm418, %v406, 0.0
        %v435 = vsel %vm418, %v407, 0.0
        %v436 = vsel %vm418, %v408, 0.0
        %vm453 = vcmask 1046528
        %v454 = vrot.slane %v419, 1
        %v455 = vrot.slane %v428, 1
        %v456 = vsel %vm453, %v454, %v455
        %v457 = vrot.slane %v420, 1
        %v458 = vrot.slane %v429, 1
        %v459 = vsel %vm453, %v457, %v458
        %v460 = vrot.slane %v421, 1
        %v461 = vrot.slane %v430, 1
        %v462 = vsel %vm453, %v460, %v461
        %v463 = vrot.slane %v422, 1
        %v464 = vrot.slane %v431, 1
        %v465 = vsel %vm453, %v463, %v464
        %v466 = vrot.slane %v423, 1
        %v467 = vrot.slane %v432, 1
        %v468 = vsel %vm453, %v466, %v467
        %v469 = vrot.slane %v424, 1
        %v470 = vrot.slane %v433, 1
        %v471 = vsel %vm453, %v469, %v470
        %v472 = vrot.slane %v425, 1
        %v473 = vrot.slane %v434, 1
        %v474 = vsel %vm453, %v472, %v473
        %v475 = vrot.slane %v426, 1
        %v476 = vrot.slane %v435, 1
        %v477 = vsel %vm453, %v475, %v476
        %478 = vrot.lane.b32.xlu0 %v456, 4
        %v479 = vpop.permute.xlu0 %478
        %480 = vrot.lane.b32.xlu0 %v459, 4
        %v481 = vpop.permute.xlu0 %480
        %482 = vrot.lane.b32.xlu0 %v462, 4
        %v483 = vpop.permute.xlu0 %482
        %484 = vrot.lane.b32.xlu0 %v465, 4
        %v485 = vpop.permute.xlu0 %484
        %486 = vrot.lane.b32.xlu0 %v468, 4
        %v487 = vpop.permute.xlu0 %486
        %488 = vrot.lane.b32.xlu0 %v471, 4
        %v489 = vpop.permute.xlu0 %488
        %490 = vrot.lane.b32.xlu0 %v474, 4
        %v491 = vpop.permute.xlu0 %490
        %492 = vrot.lane.b32.xlu0 %v477, 4
        %v493 = vpop.permute.xlu0 %492
        %vm502 = vcmask 1045504
        %v503 = vrot.slane %v419, 2
        %v504 = vrot.slane %v428, 2
        %v505 = vsel %vm502, %v503, %v504
        %v506 = vrot.slane %v420, 2
        %v507 = vrot.slane %v429, 2
        %v508 = vsel %vm502, %v506, %v507
        %v509 = vrot.slane %v421, 2
        %v510 = vrot.slane %v430, 2
        %v511 = vsel %vm502, %v509, %v510
        %v512 = vrot.slane %v422, 2
        %v513 = vrot.slane %v431, 2
        %v514 = vsel %vm502, %v512, %v513
        %v515 = vrot.slane %v423, 2
        %v516 = vrot.slane %v432, 2
        %v517 = vsel %vm502, %v515, %v516
        %v518 = vrot.slane %v424, 2
        %v519 = vrot.slane %v433, 2
        %v520 = vsel %vm502, %v518, %v519
        %v521 = vrot.slane %v425, 2
        %v522 = vrot.slane %v434, 2
        %v523 = vsel %vm502, %v521, %v522
        %v524 = vrot.slane %v426, 2
        %v525 = vrot.slane %v435, 2
        %v526 = vsel %vm502, %v524, %v525
        %527 = vrot.lane.b32.xlu0 %v505, 8
        %v528 = vpop.permute.xlu0 %527
        %529 = vrot.lane.b32.xlu0 %v508, 8
        %v530 = vpop.permute.xlu0 %529
        %531 = vrot.lane.b32.xlu0 %v511, 8
        %v532 = vpop.permute.xlu0 %531
        %533 = vrot.lane.b32.xlu0 %v514, 8
        %v534 = vpop.permute.xlu0 %533
        %535 = vrot.lane.b32.xlu0 %v517, 8
        %v536 = vpop.permute.xlu0 %535
        %537 = vrot.lane.b32.xlu0 %v520, 8
        %v538 = vpop.permute.xlu0 %537
        %539 = vrot.lane.b32.xlu0 %v523, 8
        %v540 = vpop.permute.xlu0 %539
        %541 = vrot.lane.b32.xlu0 %v526, 8
        %v542 = vpop.permute.xlu0 %541
        %552 = vrot.lane.b32.xlu0 %v420, 12
        %v553 = vpop.permute.xlu0 %552
        %554 = vrot.lane.b32.xlu0 %v421, 12
        %v555 = vpop.permute.xlu0 %554
        %556 = vrot.lane.b32.xlu0 %v422, 12
        %v557 = vpop.permute.xlu0 %556
        %558 = vrot.lane.b32.xlu0 %v423, 12
        %v559 = vpop.permute.xlu0 %558
        %560 = vrot.lane.b32.xlu0 %v424, 12
        %v561 = vpop.permute.xlu0 %560
        %562 = vrot.lane.b32.xlu0 %v425, 12
        %v563 = vpop.permute.xlu0 %562
        %564 = vrot.lane.b32.xlu0 %v426, 12
        %v565 = vpop.permute.xlu0 %564
        %566 = vrot.lane.b32.xlu0 %v427, 12
        %v567 = vpop.permute.xlu0 %566
        %v577 = vrot.slane %v427, 1
        %v578 = vrot.slane %v436, 1
        %v579 = vsel %vm453, %v577, %v578
        %580 = vrot.lane.b32.xlu0 %v459, 16
        %v581 = vpop.permute.xlu0 %580
        %582 = vrot.lane.b32.xlu0 %v462, 16
        %v583 = vpop.permute.xlu0 %582
        %584 = vrot.lane.b32.xlu0 %v465, 16
        %v585 = vpop.permute.xlu0 %584
        %586 = vrot.lane.b32.xlu0 %v468, 16
        %v587 = vpop.permute.xlu0 %586
        %588 = vrot.lane.b32.xlu0 %v471, 16
        %v589 = vpop.permute.xlu0 %588
        %590 = vrot.lane.b32.xlu0 %v474, 16
        %v591 = vpop.permute.xlu0 %590
        %592 = vrot.lane.b32.xlu0 %v477, 16
        %v593 = vpop.permute.xlu0 %592
        %594 = vrot.lane.b32.xlu0 %v579, 16
        %v595 = vpop.permute.xlu0 %594
        %v604 = vrot.slane %v427, 2
        %v605 = vrot.slane %v436, 2
        %v606 = vsel %vm502, %v604, %v605
        %607 = vrot.lane.b32.xlu0 %v508, 20
        %v608 = vpop.permute.xlu0 %607
        %609 = vrot.lane.b32.xlu0 %v511, 20
        %v610 = vpop.permute.xlu0 %609
        %611 = vrot.lane.b32.xlu0 %v514, 20
        %v612 = vpop.permute.xlu0 %611
        %613 = vrot.lane.b32.xlu0 %v517, 20
        %v614 = vpop.permute.xlu0 %613
        %615 = vrot.lane.b32.xlu0 %v520, 20
        %v616 = vpop.permute.xlu0 %615
        %617 = vrot.lane.b32.xlu0 %v523, 20
        %v618 = vpop.permute.xlu0 %617
        %619 = vrot.lane.b32.xlu0 %v526, 20
        %v620 = vpop.permute.xlu0 %619
        %621 = vrot.lane.b32.xlu0 %v606, 20
        %v622 = vpop.permute.xlu0 %621
        %631 = vrot.lane.b32.xlu0 %v421, 24
        %v632 = vpop.permute.xlu0 %631
        %633 = vrot.lane.b32.xlu0 %v422, 24
        %v634 = vpop.permute.xlu0 %633
        %635 = vrot.lane.b32.xlu0 %v423, 24
        %v636 = vpop.permute.xlu0 %635
        %637 = vrot.lane.b32.xlu0 %v424, 24
        %v638 = vpop.permute.xlu0 %637
        %639 = vrot.lane.b32.xlu0 %v425, 24
        %v640 = vpop.permute.xlu0 %639
        %641 = vrot.lane.b32.xlu0 %v426, 24
        %v642 = vpop.permute.xlu0 %641
        %643 = vrot.lane.b32.xlu0 %v427, 24
        %v644 = vpop.permute.xlu0 %643
        %645 = vrot.lane.b32.xlu0 %v419, 24
        %v646 = vpop.permute.xlu0 %645
        %655 = vrot.lane.b32.xlu0 %v462, 28
        %v656 = vpop.permute.xlu0 %655
        %657 = vrot.lane.b32.xlu0 %v465, 28
        %v658 = vpop.permute.xlu0 %657
        %659 = vrot.lane.b32.xlu0 %v468, 28
        %v660 = vpop.permute.xlu0 %659
        %661 = vrot.lane.b32.xlu0 %v471, 28
        %v662 = vpop.permute.xlu0 %661
        %663 = vrot.lane.b32.xlu0 %v474, 28
        %v664 = vpop.permute.xlu0 %663
        %665 = vrot.lane.b32.xlu0 %v477, 28
        %v666 = vpop.permute.xlu0 %665
        %667 = vrot.lane.b32.xlu0 %v579, 28
        %v668 = vpop.permute.xlu0 %667
        %669 = vrot.lane.b32.xlu0 %v456, 28
        %v670 = vpop.permute.xlu0 %669
        %679 = vrot.lane.b32.xlu0 %v511, 32
        %v680 = vpop.permute.xlu0 %679
        %681 = vrot.lane.b32.xlu0 %v514, 32
        %v682 = vpop.permute.xlu0 %681
        %683 = vrot.lane.b32.xlu0 %v517, 32
        %v684 = vpop.permute.xlu0 %683
        %685 = vrot.lane.b32.xlu0 %v520, 32
        %v686 = vpop.permute.xlu0 %685
        %687 = vrot.lane.b32.xlu0 %v523, 32
        %v688 = vpop.permute.xlu0 %687
        %689 = vrot.lane.b32.xlu0 %v526, 32
        %v690 = vpop.permute.xlu0 %689
        %691 = vrot.lane.b32.xlu0 %v606, 32
        %v692 = vpop.permute.xlu0 %691
        %693 = vrot.lane.b32.xlu0 %v505, 32
        %v694 = vpop.permute.xlu0 %693
        %vm703 = vcmask 31744
        %v704 = vsel %vm703, %v419, %v479
        %v705 = vsel %vm703, %v420, %v481
        %v706 = vsel %vm703, %v421, %v483
        %v707 = vsel %vm703, %v422, %v485
        %v708 = vsel %vm703, %v423, %v487
        %v709 = vsel %vm703, %v424, %v489
        %v710 = vsel %vm703, %v425, %v491
        %v711 = vsel %vm703, %v426, %v493
        %vm712 = vcmask 64512
        %v713 = vsel %vm712, %v704, %v528
        %v714 = vsel %vm712, %v705, %v530
        %v715 = vsel %vm712, %v706, %v532
        %v716 = vsel %vm712, %v707, %v534
        %v717 = vsel %vm712, %v708, %v536
        %v718 = vsel %vm712, %v709, %v538
        %v719 = vsel %vm712, %v710, %v540
        %v720 = vsel %vm712, %v711, %v542
        %vm721 = vcmask 97280
        %v722 = vsel %vm721, %v713, %v553
        %v723 = vsel %vm721, %v714, %v555
        %v724 = vsel %vm721, %v715, %v557
        %v725 = vsel %vm721, %v716, %v559
        %v726 = vsel %vm721, %v717, %v561
        %v727 = vsel %vm721, %v718, %v563
        %v728 = vsel %vm721, %v719, %v565
        %v729 = vsel %vm721, %v720, %v567
        %vm730 = vcmask 130048
        %v731 = vsel %vm730, %v722, %v581
        %v732 = vsel %vm730, %v723, %v583
        %v733 = vsel %vm730, %v724, %v585
        %v734 = vsel %vm730, %v725, %v587
        %v735 = vsel %vm730, %v726, %v589
        %v736 = vsel %vm730, %v727, %v591
        %v737 = vsel %vm730, %v728, %v593
        %v738 = vsel %vm730, %v729, %v595
        %vm739 = vcmask 162816
        %v740 = vsel %vm739, %v731, %v608
        %v741 = vsel %vm739, %v732, %v610
        %v742 = vsel %vm739, %v733, %v612
        %v743 = vsel %vm739, %v734, %v614
        %v744 = vsel %vm739, %v735, %v616
        %v745 = vsel %vm739, %v736, %v618
        %v746 = vsel %vm739, %v737, %v620
        %v747 = vsel %vm739, %v738, %v622
        %vm748 = vcmask 195584
        %v749 = vsel %vm748, %v740, %v632
        %v750 = vsel %vm748, %v741, %v634
        %v751 = vsel %vm748, %v742, %v636
        %v752 = vsel %vm748, %v743, %v638
        %v753 = vsel %vm748, %v744, %v640
        %v754 = vsel %vm748, %v745, %v642
        %v755 = vsel %vm748, %v746, %v644
        %v756 = vsel %vm748, %v747, %v646
        %vm757 = vcmask 228352
        %v758 = vsel %vm757, %v749, %v656
        %v759 = vsel %vm757, %v750, %v658
        %v760 = vsel %vm757, %v751, %v660
        %v761 = vsel %vm757, %v752, %v662
        %v762 = vsel %vm757, %v753, %v664
        %v763 = vsel %vm757, %v754, %v666
        %v764 = vsel %vm757, %v755, %v668
        %v765 = vsel %vm757, %v756, %v670
        %vm766 = vcmask 261120
        %v767 = vsel %vm766, %v758, %v680
        %v768 = vsel %vm766, %v759, %v682
        %v769 = vsel %vm766, %v760, %v684
        %v770 = vsel %vm766, %v761, %v686
        %v771 = vsel %vm766, %v762, %v688
        %v772 = vsel %vm766, %v763, %v690
        %v773 = vsel %vm766, %v764, %v692
        %v774 = vsel %vm766, %v765, %v694
        %v775 = vpack.c.bf16 %v768, %v767
        %v776 = vpack.c.bf16 %v770, %v769
        %v777 = vpack.c.bf16 %v772, %v771
        %v778 = vpack.c.bf16 %v774, %v773
        %v780 = vlaneseq
        %v781 = vshrl.u32 %v780, 7
        %v782 = vsub.s32 0, %v781
        %v783 = vrot.slane %v390, %v782
        %v790 = vunpack.c.l.b16 %v385
        %v791 = vunpack.c.l.b16 %v386
        %v792 = vunpack.c.l.b16 %v387
        %v793 = vunpack.c.l.b16 %v388
        %v794 = vunpack.c.l.b16 %v389
        %v795 = vpack.c.b16 %v791, %v790
        %v796 = vpack.c.b16 %v793, %v792
        %v797 = vpack.c.b16 %v794, %v794
        %vm800 = vcmask 293888
        %v802 = vsel %vm800, %v775, 0
        %v805 = vsel %vm800, %v776, 0
        %v808 = vsel %vm800, %v777, 0
        %v811 = vsel %vm800, %v778, 0
        %vm813 = vcmask 1041408
        %v815 = vsel %vm813, %v797, 0
        %817 = vmatprep.subr.bf16.mxu0 0
        %818 = vmatpush1.bf16.msra.mxu0 %v795
        %819 = vmatprep.subr.bf16.mxu0 0
        %820 = vmatpush1.bf16.msra.mxu0 %v796
        %821 = vmatprep.subr.bf16.mxu0 0
        %822 = vmatpush1.bf16.msra.mxu0 %v815
        %823 = vmatprep.subr.bf16.mxu0 0
        %824 = vmatpush1.bf16.msra.mxu0 0
        %825 = vmatprep.subr.bf16.mxu0 0
        %826 = vmatpush1.bf16.msra.mxu0 0
        %827 = vmatprep.subr.bf16.mxu0 0
        %828 = vmatpush1.bf16.msra.mxu0 0
        %829 = vmatprep.subr.bf16.mxu0 0
        %830 = vmatpush1.bf16.msra.mxu0 0
        %831 = vmatprep.subr.bf16.mxu0 0
        %832 = vmatpush1.bf16.msra.mxu0 0
        %833 = vmatprep.subr.bf16.mxu0 0
        %834 = vmatpush1.bf16.msra.mxu0 0
        %835 = vmatprep.subr.bf16.mxu0 0
        %836 = vmatpush1.bf16.msra.mxu0 0
        %837 = vmatprep.subr.bf16.mxu0 0
        %838 = vmatpush1.bf16.msra.mxu0 0
        %839 = vmatprep.subr.bf16.mxu0 0
        %840 = vmatpush1.bf16.msra.mxu0 0
        %841 = vmatprep.subr.bf16.mxu0 0
        %842 = vmatpush1.bf16.msra.mxu0 0
        %843 = vmatprep.subr.bf16.mxu0 0
        %844 = vmatpush1.bf16.msra.mxu0 0
        %845 = vmatprep.subr.bf16.mxu0 0
        %846 = vmatpush1.bf16.msra.mxu0 0
        %847 = vmatprep.subr.bf16.mxu0 0
        %848 = vmatpush1.bf16.msra.mxu0 0
        %849 = vmatprep.mubr.bf16.mxu0 0
        %850 = vmatmul.mubr.bf16.gmra.mrb[0].mxu0 %v802
        %v851 = vpop.f32.mrb[0].mxu0
        %v852 = vadd.f32 %v783, %v851
        %v853 = vpop.f32.mrb[0].mxu0
        %v854 = vpop.f32.mrb[0].mxu0
        %v855 = vadd.f32 %v783, %v854
        %v856 = vpop.f32.mrb[0].mxu0
        %857 = vmatprep.mubr.bf16.mxu0 0
        %858 = vmatmul.mubr.bf16.gmra.mrb[0].mxu0 %v805
        %v859 = vpop.f32.mrb[0].mxu0
        %v860 = vadd.f32 %v783, %v859
        %v861 = vpop.f32.mrb[0].mxu0
        %v862 = vpop.f32.mrb[0].mxu0
        %v863 = vadd.f32 %v783, %v862
        %v864 = vpop.f32.mrb[0].mxu0
        %865 = vmatprep.mubr.bf16.mxu0 0
        %866 = vmatmul.mubr.bf16.gmra.mrb[0].mxu0 %v808
        %v867 = vpop.f32.mrb[0].mxu0
        %v868 = vadd.f32 %v783, %v867
        %v869 = vpop.f32.mrb[0].mxu0
        %v870 = vpop.f32.mrb[0].mxu0
        %v871 = vadd.f32 %v783, %v870
        %v872 = vpop.f32.mrb[0].mxu0
        %873 = vmatprep.mubr.bf16.mxu0 0
        %874 = vmatmul.mubr.bf16.gmra.mrb[0].mxu0 %v811
        %v875 = vpop.f32.mrb[0].mxu0
        %v876 = vadd.f32 %v783, %v875
        %v877 = vpop.f32.mrb[0].mxu0
        %v878 = vpop.f32.mrb[0].mxu0
        %v879 = vadd.f32 %v783, %v878
        %v880 = vpop.f32.mrb[0].mxu0
        %881 = vdwg.mxu0
        %v882 = vmax.f32 %v852, 0.0
        %v883 = vmax.f32 %v855, 0.0
        %v884 = vmax.f32 %v860, 0.0
        %v885 = vmax.f32 %v863, 0.0
        %v886 = vmax.f32 %v868, 0.0
        %v887 = vmax.f32 %v871, 0.0
        %v888 = vmax.f32 %v876, 0.0
        %v889 = vmax.f32 %v879, 0.0
        %v890 = vld [vmem:[#allocation8] sm:$0xf]
        %v891 = vld [vmem:[#allocation8 + $0x4] sm:$0xf]
        %v892 = vld [vmem:[#allocation8 + $0x8] sm:$0xf]
        %v893 = vld [vmem:[#allocation8 + $0xc] sm:$0xf]
        %v894 = vld [vmem:[#allocation8 + $0x10] sm:$0xf]
        %v895 = vld [vmem:[#allocation8 + $0x14] sm:$0xf]
        %v896 = vld [vmem:[#allocation8 + $0x18] sm:$0xf]
        %v897 = vld [vmem:[#allocation8 + $0x1c] sm:$0xf]
        %v898 = vld [vmem:[#allocation8 + $0x20] sm:$0xf]
        %v899 = vld [vmem:[#allocation10] sm:$0x1]
        %v908 = vrot.slane %v882, 7
        %v909 = vrot.slane %v883, 7
        %v910 = vrot.slane %v884, 7
        %v911 = vrot.slane %v885, 7
        %v912 = vrot.slane %v886, 7
        %v913 = vrot.slane %v887, 7
        %v914 = vrot.slane %v888, 7
        %v915 = vrot.slane %v889, 7
        %v924 = vsel %vm418, 0.0, %v908
        %v925 = vsel %vm418, 0.0, %v909
        %v926 = vsel %vm418, 0.0, %v910
        %v927 = vsel %vm418, 0.0, %v911
        %v928 = vsel %vm418, 0.0, %v912
        %v929 = vsel %vm418, 0.0, %v913
        %v930 = vsel %vm418, 0.0, %v914
        %v931 = vsel %vm418, 0.0, %v915
        %v932 = vsel %vm418, %v908, 0.0
        %v933 = vsel %vm418, %v909, 0.0
        %v934 = vsel %vm418, %v910, 0.0
        %v935 = vsel %vm418, %v911, 0.0
        %v936 = vsel %vm418, %v912, 0.0
        %v937 = vsel %vm418, %v913, 0.0
        %v938 = vsel %vm418, %v914, 0.0
        %v939 = vsel %vm418, %v915, 0.0
        %v954 = vrot.slane %v924, 1
        %v955 = vrot.slane %v932, 1
        %v956 = vsel %vm453, %v954, %v955
        %v957 = vrot.slane %v925, 1
        %v958 = vrot.slane %v933, 1
        %v959 = vsel %vm453, %v957, %v958
        %v960 = vrot.slane %v926, 1
        %v961 = vrot.slane %v934, 1
        %v962 = vsel %vm453, %v960, %v961
        %v963 = vrot.slane %v927, 1
        %v964 = vrot.slane %v935, 1
        %v965 = vsel %vm453, %v963, %v964
        %v966 = vrot.slane %v928, 1
        %v967 = vrot.slane %v936, 1
        %v968 = vsel %vm453, %v966, %v967
        %v969 = vrot.slane %v929, 1
        %v970 = vrot.slane %v937, 1
        %v971 = vsel %vm453, %v969, %v970
        %v972 = vrot.slane %v930, 1
        %v973 = vrot.slane %v938, 1
        %v974 = vsel %vm453, %v972, %v973
        %975 = vrot.lane.b32.xlu0 %v456, 8
        %v976 = vpop.permute.xlu0 %975
        %977 = vrot.lane.b32.xlu0 %v956, 8
        %v978 = vpop.permute.xlu0 %977
        %979 = vrot.lane.b32.xlu0 %v959, 8
        %v980 = vpop.permute.xlu0 %979
        %981 = vrot.lane.b32.xlu0 %v962, 8
        %v982 = vpop.permute.xlu0 %981
        %983 = vrot.lane.b32.xlu0 %v965, 8
        %v984 = vpop.permute.xlu0 %983
        %985 = vrot.lane.b32.xlu0 %v968, 8
        %v986 = vpop.permute.xlu0 %985
        %987 = vrot.lane.b32.xlu0 %v971, 8
        %v988 = vpop.permute.xlu0 %987
        %989 = vrot.lane.b32.xlu0 %v974, 8
        %v990 = vpop.permute.xlu0 %989
        %v999 = vrot.slane %v924, 2
        %v1000 = vrot.slane %v932, 2
        %v1001 = vsel %vm502, %v999, %v1000
        %v1002 = vrot.slane %v925, 2
        %v1003 = vrot.slane %v933, 2
        %v1004 = vsel %vm502, %v1002, %v1003
        %v1005 = vrot.slane %v926, 2
        %v1006 = vrot.slane %v934, 2
        %v1007 = vsel %vm502, %v1005, %v1006
        %v1008 = vrot.slane %v927, 2
        %v1009 = vrot.slane %v935, 2
        %v1010 = vsel %vm502, %v1008, %v1009
        %v1011 = vrot.slane %v928, 2
        %v1012 = vrot.slane %v936, 2
        %v1013 = vsel %vm502, %v1011, %v1012
        %v1014 = vrot.slane %v929, 2
        %v1015 = vrot.slane %v937, 2
        %v1016 = vsel %vm502, %v1014, %v1015
        %v1017 = vrot.slane %v930, 2
        %v1018 = vrot.slane %v938, 2
        %v1019 = vsel %vm502, %v1017, %v1018
        %1020 = vrot.lane.b32.xlu0 %v505, 16
        %v1021 = vpop.permute.xlu0 %1020
        %1022 = vrot.lane.b32.xlu0 %v1001, 16
        %v1023 = vpop.permute.xlu0 %1022
        %1024 = vrot.lane.b32.xlu0 %v1004, 16
        %v1025 = vpop.permute.xlu0 %1024
        %1026 = vrot.lane.b32.xlu0 %v1007, 16
        %v1027 = vpop.permute.xlu0 %1026
        %1028 = vrot.lane.b32.xlu0 %v1010, 16
        %v1029 = vpop.permute.xlu0 %1028
        %1030 = vrot.lane.b32.xlu0 %v1013, 16
        %v1031 = vpop.permute.xlu0 %1030
        %1032 = vrot.lane.b32.xlu0 %v1016, 16
        %v1033 = vpop.permute.xlu0 %1032
        %1034 = vrot.lane.b32.xlu0 %v1019, 16
        %v1035 = vpop.permute.xlu0 %1034
        %1045 = vrot.lane.b32.xlu0 %v924, 24
        %v1046 = vpop.permute.xlu0 %1045
        %1047 = vrot.lane.b32.xlu0 %v925, 24
        %v1048 = vpop.permute.xlu0 %1047
        %1049 = vrot.lane.b32.xlu0 %v926, 24
        %v1050 = vpop.permute.xlu0 %1049
        %1051 = vrot.lane.b32.xlu0 %v927, 24
        %v1052 = vpop.permute.xlu0 %1051
        %1053 = vrot.lane.b32.xlu0 %v928, 24
        %v1054 = vpop.permute.xlu0 %1053
        %1055 = vrot.lane.b32.xlu0 %v929, 24
        %v1056 = vpop.permute.xlu0 %1055
        %1057 = vrot.lane.b32.xlu0 %v930, 24
        %v1058 = vpop.permute.xlu0 %1057
        %1059 = vrot.lane.b32.xlu0 %v931, 24
        %v1060 = vpop.permute.xlu0 %1059
        %v1070 = vrot.slane %v931, 1
        %v1071 = vrot.slane %v939, 1
        %v1072 = vsel %vm453, %v1070, %v1071
        %1073 = vrot.lane.b32.xlu0 %v956, 32
        %v1074 = vpop.permute.xlu0 %1073
        %1075 = vrot.lane.b32.xlu0 %v959, 32
        %v1076 = vpop.permute.xlu0 %1075
        %1077 = vrot.lane.b32.xlu0 %v962, 32
        %v1078 = vpop.permute.xlu0 %1077
        %1079 = vrot.lane.b32.xlu0 %v965, 32
        %v1080 = vpop.permute.xlu0 %1079
        %1081 = vrot.lane.b32.xlu0 %v968, 32
        %v1082 = vpop.permute.xlu0 %1081
        %1083 = vrot.lane.b32.xlu0 %v971, 32
        %v1084 = vpop.permute.xlu0 %1083
        %1085 = vrot.lane.b32.xlu0 %v974, 32
        %v1086 = vpop.permute.xlu0 %1085
        %1087 = vrot.lane.b32.xlu0 %v1072, 32
        %v1088 = vpop.permute.xlu0 %1087
        %v1097 = vrot.slane %v931, 2
        %v1098 = vrot.slane %v939, 2
        %v1099 = vsel %vm502, %v1097, %v1098
        %1100 = vrot.lane.b32.xlu0 %v1001, 40
        %v1101 = vpop.permute.xlu0 %1100
        %1102 = vrot.lane.b32.xlu0 %v1004, 40
        %v1103 = vpop.permute.xlu0 %1102
        %1104 = vrot.lane.b32.xlu0 %v1007, 40
        %v1105 = vpop.permute.xlu0 %1104
        %1106 = vrot.lane.b32.xlu0 %v1010, 40
        %v1107 = vpop.permute.xlu0 %1106
        %1108 = vrot.lane.b32.xlu0 %v1013, 40
        %v1109 = vpop.permute.xlu0 %1108
        %1110 = vrot.lane.b32.xlu0 %v1016, 40
        %v1111 = vpop.permute.xlu0 %1110
        %1112 = vrot.lane.b32.xlu0 %v1019, 40
        %v1113 = vpop.permute.xlu0 %1112
        %1114 = vrot.lane.b32.xlu0 %v1099, 40
        %v1115 = vpop.permute.xlu0 %1114
        %1124 = vrot.lane.b32.xlu0 %v925, 48
        %v1125 = vpop.permute.xlu0 %1124
        %1126 = vrot.lane.b32.xlu0 %v926, 48
        %v1127 = vpop.permute.xlu0 %1126
        %1128 = vrot.lane.b32.xlu0 %v927, 48
        %v1129 = vpop.permute.xlu0 %1128
        %1130 = vrot.lane.b32.xlu0 %v928, 48
        %v1131 = vpop.permute.xlu0 %1130
        %1132 = vrot.lane.b32.xlu0 %v929, 48
        %v1133 = vpop.permute.xlu0 %1132
        %1134 = vrot.lane.b32.xlu0 %v930, 48
        %v1135 = vpop.permute.xlu0 %1134
        %1136 = vrot.lane.b32.xlu0 %v931, 48
        %v1137 = vpop.permute.xlu0 %1136
        %1138 = vrot.lane.b32.xlu0 %v419, 48
        %v1139 = vpop.permute.xlu0 %1138
        %1148 = vrot.lane.b32.xlu0 %v959, 56
        %v1149 = vpop.permute.xlu0 %1148
        %1150 = vrot.lane.b32.xlu0 %v962, 56
        %v1151 = vpop.permute.xlu0 %1150
        %1152 = vrot.lane.b32.xlu0 %v965, 56
        %v1153 = vpop.permute.xlu0 %1152
        %1154 = vrot.lane.b32.xlu0 %v968, 56
        %v1155 = vpop.permute.xlu0 %1154
        %1156 = vrot.lane.b32.xlu0 %v971, 56
        %v1157 = vpop.permute.xlu0 %1156
        %1158 = vrot.lane.b32.xlu0 %v974, 56
        %v1159 = vpop.permute.xlu0 %1158
        %1160 = vrot.lane.b32.xlu0 %v1072, 56
        %v1161 = vpop.permute.xlu0 %1160
        %1162 = vrot.lane.b32.xlu0 %v456, 56
        %v1163 = vpop.permute.xlu0 %1162
        %1172 = vrot.lane.b32.xlu0 %v1004, 64
        %v1173 = vpop.permute.xlu0 %1172
        %1174 = vrot.lane.b32.xlu0 %v1007, 64
        %v1175 = vpop.permute.xlu0 %1174
        %1176 = vrot.lane.b32.xlu0 %v1010, 64
        %v1177 = vpop.permute.xlu0 %1176
        %1178 = vrot.lane.b32.xlu0 %v1013, 64
        %v1179 = vpop.permute.xlu0 %1178
        %1180 = vrot.lane.b32.xlu0 %v1016, 64
        %v1181 = vpop.permute.xlu0 %1180
        %1182 = vrot.lane.b32.xlu0 %v1019, 64
        %v1183 = vpop.permute.xlu0 %1182
        %1184 = vrot.lane.b32.xlu0 %v1099, 64
        %v1185 = vpop.permute.xlu0 %1184
        %1186 = vrot.lane.b32.xlu0 %v505, 64
        %v1187 = vpop.permute.xlu0 %1186
        %v1196 = vsel %vm712, %v419, %v976
        %v1197 = vsel %vm712, %v924, %v978
        %v1198 = vsel %vm712, %v925, %v980
        %v1199 = vsel %vm712, %v926, %v982
        %v1200 = vsel %vm712, %v927, %v984
        %v1201 = vsel %vm712, %v928, %v986
        %v1202 = vsel %vm712, %v929, %v988
        %v1203 = vsel %vm712, %v930, %v990
        %v1204 = vsel %vm730, %v1196, %v1021
        %v1205 = vsel %vm730, %v1197, %v1023
        %v1206 = vsel %vm730, %v1198, %v1025
        %v1207 = vsel %vm730, %v1199, %v1027
        %v1208 = vsel %vm730, %v1200, %v1029
        %v1209 = vsel %vm730, %v1201, %v1031
        %v1210 = vsel %vm730, %v1202, %v1033
        %v1211 = vsel %vm730, %v1203, %v1035
        %v1212 = vsel %vm748, %v1204, %v1046
        %v1213 = vsel %vm748, %v1205, %v1048
        %v1214 = vsel %vm748, %v1206, %v1050
        %v1215 = vsel %vm748, %v1207, %v1052
        %v1216 = vsel %vm748, %v1208, %v1054
        %v1217 = vsel %vm748, %v1209, %v1056
        %v1218 = vsel %vm748, %v1210, %v1058
        %v1219 = vsel %vm748, %v1211, %v1060
        %v1220 = vsel %vm766, %v1212, %v1074
        %v1221 = vsel %vm766, %v1213, %v1076
        %v1222 = vsel %vm766, %v1214, %v1078
        %v1223 = vsel %vm766, %v1215, %v1080
        %v1224 = vsel %vm766, %v1216, %v1082
        %v1225 = vsel %vm766, %v1217, %v1084
        %v1226 = vsel %vm766, %v1218, %v1086
        %v1227 = vsel %vm766, %v1219, %v1088
        %vm1228 = vcmask 326656
        %v1229 = vsel %vm1228, %v1220, %v1101
        %v1230 = vsel %vm1228, %v1221, %v1103
        %v1231 = vsel %vm1228, %v1222, %v1105
        %v1232 = vsel %vm1228, %v1223, %v1107
        %v1233 = vsel %vm1228, %v1224, %v1109
        %v1234 = vsel %vm1228, %v1225, %v1111
        %v1235 = vsel %vm1228, %v1226, %v1113
        %v1236 = vsel %vm1228, %v1227, %v1115
        %vm1237 = vcmask 392192
        %v1238 = vsel %vm1237, %v1229, %v1125
        %v1239 = vsel %vm1237, %v1230, %v1127
        %v1240 = vsel %vm1237, %v1231, %v1129
        %v1241 = vsel %vm1237, %v1232, %v1131
        %v1242 = vsel %vm1237, %v1233, %v1133
        %v1243 = vsel %vm1237, %v1234, %v1135
        %v1244 = vsel %vm1237, %v1235, %v1137
        %v1245 = vsel %vm1237, %v1236, %v1139
        %vm1246 = vcmask 457728
        %v1247 = vsel %vm1246, %v1238, %v1149
        %v1248 = vsel %vm1246, %v1239, %v1151
        %v1249 = vsel %vm1246, %v1240, %v1153
        %v1250 = vsel %vm1246, %v1241, %v1155
        %v1251 = vsel %vm1246, %v1242, %v1157
        %v1252 = vsel %vm1246, %v1243, %v1159
        %v1253 = vsel %vm1246, %v1244, %v1161
        %v1254 = vsel %vm1246, %v1245, %v1163
        %vm1255 = vcmask 523264
        %v1256 = vsel %vm1255, %v1247, %v1173
        %v1257 = vsel %vm1255, %v1248, %v1175
        %v1258 = vsel %vm1255, %v1249, %v1177
        %v1259 = vsel %vm1255, %v1250, %v1179
        %v1260 = vsel %vm1255, %v1251, %v1181
        %v1261 = vsel %vm1255, %v1252, %v1183
        %v1262 = vsel %vm1255, %v1253, %v1185
        %v1263 = vsel %vm1255, %v1254, %v1187
        %v1264 = vpack.c.bf16 %v1257, %v1256
        %v1265 = vpack.c.bf16 %v1259, %v1258
        %v1266 = vpack.c.bf16 %v1261, %v1260
        %v1267 = vpack.c.bf16 %v1263, %v1262
        %v1269 = vlaneseq
        %v1270 = vshrl.u32 %v1269, 7
        %v1271 = vsub.s32 0, %v1270
        %v1272 = vrot.slane %v899, %v1271
        %v1283 = vunpack.c.l.b16 %v890
        %v1284 = vunpack.c.l.b16 %v891
        %v1285 = vunpack.c.l.b16 %v892
        %v1286 = vunpack.c.l.b16 %v893
        %v1287 = vunpack.c.l.b16 %v894
        %v1288 = vunpack.c.l.b16 %v895
        %v1289 = vunpack.c.l.b16 %v896
        %v1290 = vunpack.c.l.b16 %v897
        %v1291 = vunpack.c.l.b16 %v898
        %v1292 = vpack.c.b16 %v1284, %v1283
        %v1293 = vpack.c.b16 %v1286, %v1285
        %v1294 = vpack.c.b16 %v1288, %v1287
        %v1295 = vpack.c.b16 %v1290, %v1289
        %v1296 = vpack.c.b16 %v1291, %v1291
        %vm1301 = vcmask 588800
        %v1303 = vsel %vm1301, %v1264, 0
        %v1306 = vsel %vm1301, %v1265, 0
        %v1309 = vsel %vm1301, %v1266, 0
        %v1312 = vsel %vm1301, %v1267, 0
        %vm1314 = vcmask 1043456
        %v1316 = vsel %vm1314, %v1296, 0
        %1318 = vmatprep.subr.bf16.mxu0 0
        %1319 = vmatpush1.bf16.msra.mxu0 %v1292
        %1320 = vmatprep.subr.bf16.mxu0 0
        %1321 = vmatpush1.bf16.msra.mxu0 %v1293
        %1322 = vmatprep.subr.bf16.mxu0 0
        %1323 = vmatpush1.bf16.msra.mxu0 %v1294
        %1324 = vmatprep.subr.bf16.mxu0 0
        %1325 = vmatpush1.bf16.msra.mxu0 %v1295
        %1326 = vmatprep.subr.bf16.mxu0 0
        %1327 = vmatpush1.bf16.msra.mxu0 %v1316
        %1328 = vmatprep.subr.bf16.mxu0 0
        %1329 = vmatpush1.bf16.msra.mxu0 0
        %1330 = vmatprep.subr.bf16.mxu0 0
        %1331 = vmatpush1.bf16.msra.mxu0 0
        %1332 = vmatprep.subr.bf16.mxu0 0
        %1333 = vmatpush1.bf16.msra.mxu0 0
        %1334 = vmatprep.subr.bf16.mxu0 0
        %1335 = vmatpush1.bf16.msra.mxu0 0
        %1336 = vmatprep.subr.bf16.mxu0 0
        %1337 = vmatpush1.bf16.msra.mxu0 0
        %1338 = vmatprep.subr.bf16.mxu0 0
        %1339 = vmatpush1.bf16.msra.mxu0 0
        %1340 = vmatprep.subr.bf16.mxu0 0
        %1341 = vmatpush1.bf16.msra.mxu0 0
        %1342 = vmatprep.subr.bf16.mxu0 0
        %1343 = vmatpush1.bf16.msra.mxu0 0
        %1344 = vmatprep.subr.bf16.mxu0 0
        %1345 = vmatpush1.bf16.msra.mxu0 0
        %1346 = vmatprep.subr.bf16.mxu0 0
        %1347 = vmatpush1.bf16.msra.mxu0 0
        %1348 = vmatprep.subr.bf16.mxu0 0
        %1349 = vmatpush1.bf16.msra.mxu0 0
        %1350 = vmatprep.mubr.bf16.mxu0 0
        %1351 = vmatmul.mubr.bf16.gmra.mrb[0].mxu0 %v1303
        %v1352 = vpop.f32.mrb[0].mxu0
        %v1353 = vadd.f32 %v1272, %v1352
        %v1354 = vpop.f32.mrb[0].mxu0
        %v1355 = vpop.f32.mrb[0].mxu0
        %v1356 = vadd.f32 %v1272, %v1355
        %v1357 = vpop.f32.mrb[0].mxu0
        %1358 = vmatprep.mubr.bf16.mxu0 0
        %1359 = vmatmul.mubr.bf16.gmra.mrb[0].mxu0 %v1306
        %v1360 = vpop.f32.mrb[0].mxu0
        %v1361 = vadd.f32 %v1272, %v1360
        %v1362 = vpop.f32.mrb[0].mxu0
        %v1363 = vpop.f32.mrb[0].mxu0
        %v1364 = vadd.f32 %v1272, %v1363
        %v1365 = vpop.f32.mrb[0].mxu0
        %1366 = vmatprep.mubr.bf16.mxu0 0
        %1367 = vmatmul.mubr.bf16.gmra.mrb[0].mxu0 %v1309
        %v1368 = vpop.f32.mrb[0].mxu0
        %v1369 = vadd.f32 %v1272, %v1368
        %v1370 = vpop.f32.mrb[0].mxu0
        %v1371 = vpop.f32.mrb[0].mxu0
        %v1372 = vadd.f32 %v1272, %v1371
        %v1373 = vpop.f32.mrb[0].mxu0
        %1374 = vmatprep.mubr.bf16.mxu0 0
        %1375 = vmatmul.mubr.bf16.gmra.mrb[0].mxu0 %v1312
        %v1376 = vpop.f32.mrb[0].mxu0
        %v1377 = vadd.f32 %v1272, %v1376
        %v1378 = vpop.f32.mrb[0].mxu0
        %v1379 = vpop.f32.mrb[0].mxu0
        %v1380 = vadd.f32 %v1272, %v1379
        %v1381 = vpop.f32.mrb[0].mxu0
        %1382 = vdwg.mxu0
        %v1383 = vmax.f32 %v1353, 0.0
        %v1384 = vmax.f32 %v1356, 0.0
        %v1385 = vmax.f32 %v1361, 0.0
        %v1386 = vmax.f32 %v1364, 0.0
        %v1387 = vmax.f32 %v1369, 0.0
        %v1388 = vmax.f32 %v1372, 0.0
        %v1389 = vmax.f32 %v1377, 0.0
        %v1390 = vmax.f32 %v1380, 0.0
        %1391 = vst.msk [vmem:[%s296] sm:$0xff] %vm712, %v1383
        %1392 = vst.msk [vmem:[%s296 + $0x8] sm:$0xff] %vm712, %v1384
        %1393 = vst.msk [vmem:[%s296 + $0x10] sm:$0xff] %vm712, %v1385
        %1394 = vst.msk [vmem:[%s296 + $0x18] sm:$0xff] %vm712, %v1386
        %1395 = vst.msk [vmem:[%s296 + $0x20] sm:$0xff] %vm712, %v1387
        %1396 = vst.msk [vmem:[%s296 + $0x28] sm:$0xff] %vm712, %v1388
        %1397 = vst.msk [vmem:[%s296 + $0x30] sm:$0xff] %vm712, %v1389
        %1398 = vst.msk [vmem:[%s296 + $0x38] sm:$0xff] %vm712, %v1390
        %s1399 = sand.u32 %s142, 1
        %s1400 = scalar_lea.sflag [#allocation4], %s1399
        %s1401 = sand.u32 %s142, 1
        %s1402 = smul.addr %s1401, 64
        %s1403 = scalar_lea.vmem [#allocation11], %s1402
        // Predicated region
        $region61: #{tpu_custom_call.1} parent=39 // pred_check
          %p1404 = pneg %p152
        $region62: #{tpu_custom_call.1} parent=39 // pred_check_branch
          %1406 = sbr.rel (%p1404) target = $region64
        $region63: #{tpu_custom_call.1} parent=39 // pred_region
          %s1408 = ssub.s32 1024, 1024
          %1409 = vsyncadd %s1400, %s1408
          %s1410 = smul.addr %s24, 8
          %s1411 = smul.addr %s1410, 128
          %s1412 = scalar_lea.hbm %s5, %s1411
          %s1413 = sshll.u32 %s1403, 4
          %s1414 = int_to_ptr.vmem [resolvable:$true] %s1413
          %1419 = dma.vmem_to_hbm [thread:$0]  %s1414, 1024, %s1412, %s1400, 128, 128, 8
        $region64: #{tpu_custom_call.1} parent=39 // pred_fallthru
          _
      $region40: #{tpu_custom_call.1} parent=5 // pred_fallthru
        _
      %p1420 = scmp.le.s32.totalorder 2, %s19
      // Predicated region
      $region65: #{tpu_custom_call.1} parent=5 // pred_check
        %p1421 = pneg %p1420
      $region66: #{tpu_custom_call.1} parent=5 // pred_check_branch
        %1423 = sbr.rel (%p1421) target = $region68
      $region67: #{tpu_custom_call.1} parent=5 // pred_region
        %s1424 = ssub.s32 %s19, 2
        // Predicated region
        $region69: #{tpu_custom_call.1} parent=67 // pred_check
          %p1425 = pneg %p158
        $region70: #{tpu_custom_call.1} parent=67 // pred_check_branch
          %1427 = sbr.rel (%p1425) target = $region72
        $region71: #{tpu_custom_call.1} parent=67 // pred_region
          %s1428 = sand.u32 %s143, 1
          %s1429 = scalar_lea.sflag [#allocation4], %s1428
          %s1430 = sand.u32 %s143, 1
          %s1431 = smul.addr %s1430, 64
          %s1432 = scalar_lea.vmem [#allocation11], %s1431
          %1433 = dma.done %s1429, 1024
        $region72: #{tpu_custom_call.1} parent=67 // pred_fallthru
          _
      $region68: #{tpu_custom_call.1} parent=5 // pred_fallthru
        _
    $region6: #{tpu_custom_call.1} parent=1 // loop_footer
      %s23 = sadd.s32 1, %s19
    $region7: #{tpu_custom_call.1} parent=1 // loop_footer_branch
      %18 = sbr.rel target = $region3
    $region8: #{tpu_custom_call.1} parent=1 // loop_exit
      _
    %1434 = vsyncpa [#allocation3], 1
    %s1435 = scalar_lea.sflag [#allocation3], 1
    %1436 = vsyncpa %s1435, 1
    %1437 = vsyncpa [#allocation6], 1
    %1438 = vsyncpa [#allocation9], 1
    %1439 = vsyncpa [#allocation4], 1
    %s1440 = scalar_lea.sflag [#allocation4], 1
    %1441 = vsyncpa %s1440, 1

</llo_original>
